<compile_context>
chip_gen: v7x
topology: tpu7x:2x2x1
jax: 0.10.0
libtpu: 0.0.40
codegen_flags: <defaults>
</compile_context>

<pallas_src>
import functools

import jax
import jax.numpy as jnp
from jax.experimental import pallas as pl
from jax.experimental.pallas import tpu as pltpu


def _round_up(n, m):
    return ((n + m - 1) // m) * m


def _fbpinn_fused_kernel(x_ref, w0_ref, b0_ref, *refs,
                         d0, width, sigma, n_sub, n_hidden_layers, matmul_dtype):
    if n_hidden_layers > 1:
        wh_ref, bh_ref, wo_ref, bo_ref, out_ref = refs
    else:
        wh_ref = bh_ref = None
        wo_ref, bo_ref, out_ref = refs

    lowp = jnp.dtype(matmul_dtype)
    use_lowp = lowp != jnp.dtype(jnp.float32)

    x = x_ref[...]                                        # (1, T) raw coords, lane-dense

    # ---- fused input layer (batch normalization already folded into w0/b0) ----
    #   h[s*H + j, n] = tanh(w0'[s, j] * x[n] + b0'[s, j])
    h = jnp.tanh(w0_ref[...] * x + b0_ref[...])           # (S*H, T)

    # ---- fused hidden layers: one block-diagonal (S*H, S*H) MXU matmul per layer ----
    for l in range(n_hidden_layers - 1):                  # static unroll
        wh = wh_ref[l]
        hm = h
        if use_lowp:
            wh = wh.astype(lowp)
            hm = hm.astype(lowp)
        h = jnp.tanh(
            jnp.dot(wh, hm, preferred_element_type=jnp.float32) + bh_ref[l]
        )                                                 # (S*H, T)

    # ---- fused output layer (1/w already folded into wo/bo) ----
    wo = wo_ref[...]
    hm = h
    if use_lowp:
        wo = wo.astype(lowp)
        hm = hm.astype(lowp)
    u = jnp.dot(wo, hm, preferred_element_type=jnp.float32) + bo_ref[...]   # (S, T)

    # ---- vectorized windows: two sublane-dense (S, T) sigmoid passes ----
    inv_sigma = 1.0 / sigma
    row = jax.lax.broadcasted_iota(jnp.int32, (n_sub, 1), 0)        # (S, 1)
    a_col = d0 + row.astype(jnp.float32) * width                     # left boundary a_s
    left = jax.nn.sigmoid((x - a_col) * inv_sigma)                   # (S, T)
    right = jax.nn.sigmoid((a_col + width - x) * inv_sigma)          # (S, T), b_s = a_s+width
    left = jnp.where(row == 0, 1.0, left)          # first subdomain: right sigmoid only
    if n_sub > 1:                                  # PyTorch branch order: n_sub==1 keeps right
        right = jnp.where(row == n_sub - 1, 1.0, right)
    win = left * right                                               # (S, T)

    # ---- windowed sum over subdomains: one sublane reduce ----
    out_ref[...] = jnp.sum(win * u, axis=0, keepdims=True)           # (1, T)


def pack_fbpinn_params(params, *, w, n_hidden_layers):
    """One-time packing of the S per-subdomain MLPs into a fused block-diagonal net."""
    S, _, H = params["w0"].shape
    SH = S * H
    L = n_hidden_layers

    packed = {
        "w0": params["w0"].reshape(SH, 1).astype(jnp.float32),
        "b0": params["b0"].reshape(SH, 1).astype(jnp.float32),
    }
    if L > 1:
        # per-block transpose so the kernel computes  W^T @ h  in the (features, N) layout
        wh = jnp.swapaxes(params["wh"].astype(jnp.float32), -1, -2)   # (S, L-1, H, H)
        wh = jnp.swapaxes(wh, 0, 1)                                   # (L-1, S, H, H)
        eye = jnp.eye(S, dtype=jnp.float32)[None, :, None, :, None]   # (1, S, 1, S, 1)
        packed["wh"] = (wh[:, :, :, None, :] * eye).reshape(L - 1, SH, SH)
        packed["bh"] = jnp.swapaxes(params["bh"].astype(jnp.float32), 0, 1).reshape(L - 1, SH, 1)

    # output layer with the 1/w unnormalization folded in, laid out as (S, SH) block-diag
    wo = params["wo"].astype(jnp.float32)[:, :, 0] / w                # (S, H)
    eye_s = jnp.eye(S, dtype=jnp.float32)
    packed["wo"] = (eye_s[:, :, None] * wo[None, :, :]).reshape(S, SH)
    packed["bo"] = params["bo"].reshape(S, 1).astype(jnp.float32) / w
    return packed


def make_fbpinn_forward(params, *, domain_extrema, sigma, w, n_hidden_layers,
                        n_tile=None, matmul_dtype=jnp.float32):
    """Pack the parameters once and return a jitted forward(x) -> (N, 1)."""
    S, _, H = params["w0"].shape
    SH = S * H
    L = n_hidden_layers
    d0, d1 = float(domain_extrema[0]), float(domain_extrema[1])
    width = (d1 - d0) / S

    packed = jax.device_put(pack_fbpinn_params(params, w=w, n_hidden_layers=L))

    kernel = functools.partial(
        _fbpinn_fused_kernel,
        d0=d0, width=width, sigma=float(sigma),
        n_sub=S, n_hidden_layers=L, matmul_dtype=matmul_dtype,
    )

    def _call_pallas(x_row, w0s, b0s, n_pad, tile):
        grid_n = n_pad // tile

        in_specs = [
            pl.BlockSpec((1, tile), lambda i: (0, i)),            # x (raw, lane-dense)
            pl.BlockSpec((SH, 1), lambda i: (0, 0)),              # w0 (norm folded per call)
            pl.BlockSpec((SH, 1), lambda i: (0, 0)),              # b0 (norm folded per call)
        ]
        args = [x_row, w0s, b0s]
        if L > 1:                                                 # skip dummy blocks if L==1
            in_specs += [
                pl.BlockSpec((L - 1, SH, SH), lambda i: (0, 0, 0)),   # block-diag Wh^T
                pl.BlockSpec((L - 1, SH, 1), lambda i: (0, 0, 0)),    # hidden biases
            ]
            args += [packed["wh"], packed["bh"]]
        in_specs += [
            pl.BlockSpec((S, SH), lambda i: (0, 0)),              # wo^T / w (block-diag)
            pl.BlockSpec((S, 1), lambda i: (0, 0)),               # bo / w
        ]
        args += [packed["wo"], packed["bo"]]

        flops = n_pad * (2 * SH + (L - 1) * 2 * SH * SH + 2 * S * SH + 8 * S)
        transcendentals = n_pad * (L * SH + 2 * S)
        bytes_accessed = 4 * (2 * n_pad + 2 * SH + (L - 1) * (SH * SH + SH) + S * SH + S)

        return pl.pallas_call(
            kernel,
            out_shape=jax.ShapeDtypeStruct((1, n_pad), jnp.float32),
            grid_spec=pltpu.PrefetchScalarGridSpec(
                num_scalar_prefetch=0,
                grid=(grid_n,),
                in_specs=in_specs,
                out_specs=pl.BlockSpec((1, tile), lambda i: (0, i)),
            ),
            compiler_params=pltpu.CompilerParams(
                dimension_semantics=("parallel",)),
            cost_estimate=pl.CostEstimate(
                flops=flops, transcendentals=transcendentals,
                bytes_accessed=bytes_accessed),
        )(*args)

    @jax.jit
    def forward(x):
        N = x.shape[0]
        x_row = x.reshape(1, N).astype(jnp.float32)

        # Batch-global normalization (hoisted; folded into the packed input layer).
        # NOTE: degenerate all-equal x gives inf/NaN, same as the PyTorch reference.
        x_min = jnp.min(x_row)
        x_max = jnp.max(x_row)
        alpha = 2.0 / (x_max - x_min)
        beta = -2.0 * x_min / (x_max - x_min) - 1.0
        w0s = packed["w0"] * alpha                 # (SH, 1) — 128 floats per call
        b0s = packed["w0"] * beta + packed["b0"]   # (SH, 1)

        # Lane tiling: multiples of 128, capped at 2048 (fits v7x's 64 MiB VMEM with
        # margin); prefer >=2 grid steps when N allows (engages v7x's 2nd TensorCore).
        if n_tile is None:
            tile = min(2048, _round_up(N, 128))
            if N >= 256 and _round_up(N, 128) // tile < 2:
                tile = _round_up(_round_up(N, 128) // 2, 128)
        else:
            tile = _round_up(n_tile, 128)
        n_pad = _round_up(N, tile)
        x_row = jnp.pad(x_row, ((0, 0), (0, n_pad - N)))

        out_row = _call_pallas(x_row, w0s, b0s, n_pad, tile)
        return out_row[:, :N].reshape(N, 1)

    return forward


def fbpinn_reference(x, params, *, domain_extrema, sigma, w, n_hidden_layers):
    """Pure-JAX reference mirroring the PyTorch forward (unfused)."""
    d0, d1 = domain_extrema
    S = params["w0"].shape[0]
    width = (d1 - d0) / S
    x_min, x_max = x.min(), x.max()
    xn = 2.0 * (x - x_min) / (x_max - x_min) - 1.0
    out = jnp.zeros_like(x)
    for i in range(S):
        a = d0 + i * width
        b = d0 + (i + 1) * width
        wl = jax.nn.sigmoid((b - x) / sigma)
        wr = jax.nn.sigmoid((x - a) / sigma)
        if i == 0:
            win = wl
        elif i == S - 1:
            win = wr
        else:
            win = wl * wr
        h = jnp.tanh(xn * params["w0"][i, 0] + params["b0"][i, 0])
        for l in range(n_hidden_layers - 1):
            h = jnp.tanh(h @ params["wh"][i, l] + params["bh"][i, l])
        u = h @ params["wo"][i] + params["bo"][i]
        out = out + win * (u / w)
    return out


def init_params(key, n_subdomains, neurons, n_hidden_layers):
    """Deterministic synthetic init of the per-subdomain MLP weights (stacked)."""
    S, H, L = n_subdomains, neurons, n_hidden_layers
    k0, k1, k2, k3, k4, k5 = jax.random.split(key, 6)
    scale_h = 1.0 / jnp.sqrt(H)
    return {
        "w0": jax.random.normal(k0, (S, 1, H), jnp.float32),
        "b0": 0.1 * jax.random.normal(k1, (S, 1, H), jnp.float32),
        "wh": scale_h * jax.random.normal(k2, (S, L - 1, H, H), jnp.float32),
        "bh": 0.1 * jax.random.normal(k3, (S, L - 1, H), jnp.float32),
        "wo": scale_h * jax.random.normal(k4, (S, H, 1), jnp.float32),
        "bo": 0.1 * jax.random.normal(k5, (S, 1, 1), jnp.float32),
    }


if __name__ == "__main__":
    # Problem setup consistent with the FBPINN cosine problem (small synthetic sizes).
    domain_extrema = (-1.0, 1.0)
    n_subdomains = 4
    sigma = 0.05
    n_hidden_layers = 2
    neurons = 32            # S*H = 128 -> hidden matmuls exactly fill 128 lanes
    w = 15.0
    N = 256                 # number of collocation points

    key = jax.random.PRNGKey(0)
    kx, kp = jax.random.split(key)
    params = init_params(kp, n_subdomains, neurons, n_hidden_layers)
    x = jax.random.uniform(kx, (N, 1), jnp.float32,
                           minval=domain_extrema[0], maxval=domain_extrema[1])

    # Pack params + build jitted forward ONCE; per-call path is a single jitted program.
    forward = make_fbpinn_forward(params, domain_extrema=domain_extrema,
                                  sigma=sigma, w=w, n_hidden_layers=n_hidden_layers)

    out = jax.block_until_ready(forward(x))

    ref = fbpinn_reference(x, params, domain_extrema=domain_extrema,
                           sigma=sigma, w=w, n_hidden_layers=n_hidden_layers)
    assert out.shape == (N, 1) and out.dtype == jnp.float32
    assert jnp.allclose(out, ref, atol=5e-5, rtol=5e-4), "mismatch vs pure-JAX reference"

    # TODO(synk): loss_function / fit (autograd-based training loop, Adam) are outside the
    # forward pass and not implemented as Pallas kernels.
    print("KERNEL_OK")
</pallas_src>

<mosaic_0001>
module attributes {stable_mosaic.version = 11 : i64} {
  func.func @_fbpinn_fused_kernel(%arg0: i32, %arg1: memref<1x128xf32, #tpu.memory_space<vmem>>, %arg2: memref<128x1xf32, #tpu.memory_space<vmem>>, %arg3: memref<128x1xf32, #tpu.memory_space<vmem>>, %arg4: memref<1x128x128xf32, #tpu.memory_space<vmem>>, %arg5: memref<1x128x1xf32, #tpu.memory_space<vmem>>, %arg6: memref<4x128xf32, #tpu.memory_space<vmem>>, %arg7: memref<4x1xf32, #tpu.memory_space<vmem>>, %arg8: memref<1x128xf32, #tpu.memory_space<vmem>>) attributes {dimension_semantics = [#tpu.dimension_semantics<parallel>], iteration_bounds = array<i64: 2>, scalar_prefetch = 0 : i64, scratch_operands = 0 : i64, tpu.core_type = #tpu.core_type<tc>, window_params = [{transform_indices = @transform_0, window_bounds = array<i64: 1, 128>}, {pipeline_mode = #tpu.pipeline_mode<synchronous>, transform_indices = @transform_1, window_bounds = array<i64: 128, 1>}, {pipeline_mode = #tpu.pipeline_mode<synchronous>, transform_indices = @transform_2, window_bounds = array<i64: 128, 1>}, {pipeline_mode = #tpu.pipeline_mode<synchronous>, transform_indices = @transform_3, window_bounds = array<i64: 1, 128, 128>}, {pipeline_mode = #tpu.pipeline_mode<synchronous>, transform_indices = @transform_4, window_bounds = array<i64: 1, 128, 1>}, {pipeline_mode = #tpu.pipeline_mode<synchronous>, transform_indices = @transform_5, window_bounds = array<i64: 4, 128>}, {pipeline_mode = #tpu.pipeline_mode<synchronous>, transform_indices = @transform_6, window_bounds = array<i64: 4, 1>}, {transform_indices = @transform_7, window_bounds = array<i64: 1, 128>}]} {
    %c0 = arith.constant 0 : index
    %c0_0 = arith.constant 0 : index
    %0 = vector.load %arg1[%c0, %c0_0] : memref<1x128xf32, #tpu.memory_space<vmem>>, vector<1x128xf32>
    %c0_1 = arith.constant 0 : index
    %c0_2 = arith.constant 0 : index
    %1 = vector.load %arg2[%c0_1, %c0_2] : memref<128x1xf32, #tpu.memory_space<vmem>>, vector<128x1xf32>
    %2 = vector.broadcast %1 : vector<128x1xf32> to vector<128x128xf32>
    %3 = vector.broadcast %0 : vector<1x128xf32> to vector<128x128xf32>
    %4 = arith.mulf %2, %3 : vector<128x128xf32>
    %c0_3 = arith.constant 0 : index
    %c0_4 = arith.constant 0 : index
    %5 = vector.load %arg3[%c0_3, %c0_4] : memref<128x1xf32, #tpu.memory_space<vmem>>, vector<128x1xf32>
    %6 = vector.broadcast %5 : vector<128x1xf32> to vector<128x128xf32>
    %7 = arith.addf %4, %6 : vector<128x128xf32>
    %8 = math.tanh %7 : vector<128x128xf32>
    %c0_5 = arith.constant 0 : index
    %c0_6 = arith.constant 0 : index
    %c0_7 = arith.constant 0 : index
    %9 = vector.load %arg4[%c0_5, %c0_6, %c0_7] : memref<1x128x128xf32, #tpu.memory_space<vmem>>, vector<1x128x128xf32>
    %10 = vector.shape_cast %9 : vector<1x128x128xf32> to vector<128x128xf32>
    %cst = arith.constant dense<0.000000e+00> : vector<128x128xf32>
    %11 = tpu.matmul %10, %8, %cst {dimension_numbers = #tpu.dot_dimension_numbers<[1], [0], [0], [1], [0, 0, 1, 1], [], []>} : vector<128x128xf32>, vector<128x128xf32>, vector<128x128xf32> -> vector<128x128xf32>
    %c0_8 = arith.constant 0 : index
    %c0_9 = arith.constant 0 : index
    %c0_10 = arith.constant 0 : index
    %12 = vector.load %arg5[%c0_8, %c0_9, %c0_10] : memref<1x128x1xf32, #tpu.memory_space<vmem>>, vector<1x128x1xf32>
    %13 = vector.shape_cast %12 : vector<1x128x1xf32> to vector<128x1xf32>
    %14 = vector.broadcast %13 : vector<128x1xf32> to vector<128x128xf32>
    %15 = arith.addf %11, %14 : vector<128x128xf32>
    %16 = math.tanh %15 : vector<128x128xf32>
    %c0_11 = arith.constant 0 : index
    %c0_12 = arith.constant 0 : index
    %17 = vector.load %arg6[%c0_11, %c0_12] : memref<4x128xf32, #tpu.memory_space<vmem>>, vector<4x128xf32>
    %cst_13 = arith.constant dense<0.000000e+00> : vector<4x128xf32>
    %18 = tpu.matmul %17, %16, %cst_13 {dimension_numbers = #tpu.dot_dimension_numbers<[1], [0], [0], [1], [0, 0, 1, 1], [], []>} : vector<4x128xf32>, vector<128x128xf32>, vector<4x128xf32> -> vector<4x128xf32>
    %c0_14 = arith.constant 0 : index
    %c0_15 = arith.constant 0 : index
    %19 = vector.load %arg7[%c0_14, %c0_15] : memref<4x1xf32, #tpu.memory_space<vmem>>, vector<4x1xf32>
    %20 = vector.broadcast %19 : vector<4x1xf32> to vector<4x128xf32>
    %21 = arith.addf %18, %20 : vector<4x128xf32>
    %22 = tpu.iota {dimensions = array<i32: 0>} : vector<4x1xi32>
    %23 = arith.sitofp %22 : vector<4x1xi32> to vector<4x1xf32>
    %cst_16 = arith.constant 5.000000e-01 : f32
    %24 = vector.broadcast %cst_16 : f32 to vector<4x1xf32>
    %25 = arith.mulf %23, %24 : vector<4x1xf32>
    %cst_17 = arith.constant -1.000000e+00 : f32
    %26 = vector.broadcast %cst_17 : f32 to vector<4x1xf32>
    %27 = arith.addf %26, %25 : vector<4x1xf32>
    %28 = vector.broadcast %0 : vector<1x128xf32> to vector<4x128xf32>
    %29 = vector.broadcast %27 : vector<4x1xf32> to vector<4x128xf32>
    %30 = arith.subf %28, %29 : vector<4x128xf32>
    %cst_18 = arith.constant 2.000000e+01 : f32
    %31 = vector.broadcast %cst_18 : f32 to vector<4x128xf32>
    %32 = arith.mulf %30, %31 : vector<4x128xf32>
    %33 = arith.negf %32 : vector<4x128xf32>
    %34 = math.exp %33 : vector<4x128xf32>
    %cst_19 = arith.constant 1.000000e+00 : f32
    %35 = vector.broadcast %cst_19 : f32 to vector<4x128xf32>
    %36 = arith.addf %35, %34 : vector<4x128xf32>
    %37 = arith.divf %35, %36 : vector<4x128xf32>
    %cst_20 = arith.constant 5.000000e-01 : f32
    %38 = vector.broadcast %cst_20 : f32 to vector<4x1xf32>
    %39 = arith.addf %27, %38 : vector<4x1xf32>
    %40 = vector.broadcast %39 : vector<4x1xf32> to vector<4x128xf32>
    %41 = vector.broadcast %0 : vector<1x128xf32> to vector<4x128xf32>
    %42 = arith.subf %40, %41 : vector<4x128xf32>
    %cst_21 = arith.constant 2.000000e+01 : f32
    %43 = vector.broadcast %cst_21 : f32 to vector<4x128xf32>
    %44 = arith.mulf %42, %43 : vector<4x128xf32>
    %45 = arith.negf %44 : vector<4x128xf32>
    %46 = math.exp %45 : vector<4x128xf32>
    %cst_22 = arith.constant 1.000000e+00 : f32
    %47 = vector.broadcast %cst_22 : f32 to vector<4x128xf32>
    %48 = arith.addf %47, %46 : vector<4x128xf32>
    %49 = arith.divf %47, %48 : vector<4x128xf32>
    %c0_i32 = arith.constant 0 : i32
    %50 = vector.broadcast %c0_i32 : i32 to vector<4x1xi32>
    %51 = arith.cmpi eq, %22, %50 : vector<4x1xi32>
    %cst_23 = arith.constant 1.000000e+00 : f32
    %52 = vector.shape_cast %51 : vector<4x1xi1> to vector<4x1xi1>
    %53 = vector.broadcast %52 : vector<4x1xi1> to vector<4x128xi1>
    %54 = vector.broadcast %cst_23 : f32 to vector<4x128xf32>
    %55 = arith.select %53, %54, %37 : vector<4x128xi1>, vector<4x128xf32>
    %c3_i32 = arith.constant 3 : i32
    %56 = vector.broadcast %c3_i32 : i32 to vector<4x1xi32>
    %57 = arith.cmpi eq, %22, %56 : vector<4x1xi32>
    %cst_24 = arith.constant 1.000000e+00 : f32
    %58 = vector.shape_cast %57 : vector<4x1xi1> to vector<4x1xi1>
    %59 = vector.broadcast %58 : vector<4x1xi1> to vector<4x128xi1>
    %60 = vector.broadcast %cst_24 : f32 to vector<4x128xf32>
    %61 = arith.select %59, %60, %49 : vector<4x128xi1>, vector<4x128xf32>
    %62 = arith.mulf %55, %61 : vector<4x128xf32>
    %63 = arith.mulf %62, %21 : vector<4x128xf32>
    %cst_25 = arith.constant dense<0.000000e+00> : vector<128xf32>
    %64 = vector.multi_reduction <add>, %63, %cst_25 [0] : vector<4x128xf32> to vector<128xf32>
    %65 = vector.shape_cast %64 : vector<128xf32> to vector<1x128xf32>
    %c0_26 = arith.constant 0 : index
    %c0_27 = arith.constant 0 : index
    %66 = vector.load %arg8[%c0_26, %c0_27] : memref<1x128xf32, #tpu.memory_space<vmem>>, vector<1x128xf32>
    tpu.vector_store %arg8[%c0_26, %c0_27], %65 {strides = array<i32>} : memref<1x128xf32, #tpu.memory_space<vmem>>, vector<1x128xf32>,
    return
  }
  func.func @transform_0(%arg0: i32) -> (i32, i32) {
    %c0_i32 = arith.constant 0 : i32
    %c0_i32_0 = arith.constant 0 : i32
    return %c0_i32, %arg0 : i32, i32
  }
  func.func @transform_1(%arg0: i32) -> (i32, i32) {
    %c0_i32 = arith.constant 0 : i32
    %c0_i32_0 = arith.constant 0 : i32
    %c0_i32_1 = arith.constant 0 : i32
    return %c0_i32, %c0_i32_0 : i32, i32
  }
  func.func @transform_2(%arg0: i32) -> (i32, i32) {
    %c0_i32 = arith.constant 0 : i32
    %c0_i32_0 = arith.constant 0 : i32
    %c0_i32_1 = arith.constant 0 : i32
    return %c0_i32, %c0_i32_0 : i32, i32
  }
  func.func @transform_3(%arg0: i32) -> (i32, i32, i32) {
    %c0_i32 = arith.constant 0 : i32
    %c0_i32_0 = arith.constant 0 : i32
    %c0_i32_1 = arith.constant 0 : i32
    %c0_i32_2 = arith.constant 0 : i32
    return %c0_i32, %c0_i32_0, %c0_i32_1 : i32, i32, i32
  }
  func.func @transform_4(%arg0: i32) -> (i32, i32, i32) {
    %c0_i32 = arith.constant 0 : i32
    %c0_i32_0 = arith.constant 0 : i32
    %c0_i32_1 = arith.constant 0 : i32
    %c0_i32_2 = arith.constant 0 : i32
    return %c0_i32, %c0_i32_0, %c0_i32_1 : i32, i32, i32
  }
  func.func @transform_5(%arg0: i32) -> (i32, i32) {
    %c0_i32 = arith.constant 0 : i32
    %c0_i32_0 = arith.constant 0 : i32
    %c0_i32_1 = arith.constant 0 : i32
    return %c0_i32, %c0_i32_0 : i32, i32
  }
  func.func @transform_6(%arg0: i32) -> (i32, i32) {
    %c0_i32 = arith.constant 0 : i32
    %c0_i32_0 = arith.constant 0 : i32
    %c0_i32_1 = arith.constant 0 : i32
    return %c0_i32, %c0_i32_0 : i32, i32
  }
  func.func @transform_7(%arg0: i32) -> (i32, i32) {
    %c0_i32 = arith.constant 0 : i32
    %c0_i32_0 = arith.constant 0 : i32
    return %c0_i32, %arg0 : i32, i32
  }
}

</mosaic_0001>

<llo_original>
// kernel: forward.1
$region0: #{forward.1}
  #allocation0 [shape = 'u32[]', space=smem, size = 0x4, offset = 0x4, fixed_abs, tag = 'smem constant byte address 0x4 - core index']
  #allocation1 [shape = 'u32[144,128]{1,0:T(1,128)}', space=vmem, size = 0x12000, scoped, tag = 'internal scratch']
  %s0 = inlined_call_operand.vmem [shape: f32[1,256], index: 0, kind: input, shape index: {}]
  %s1 = inlined_call_operand.vmem [shape: f32[128,1], index: 1, kind: input, shape index: {}]
  %s2 = inlined_call_operand.vmem [shape: f32[128,1], index: 2, kind: input, shape index: {}]
  %s3 = inlined_call_operand.vmem [shape: f32[1,128,128], index: 3, kind: input, shape index: {}]
  %s4 = inlined_call_operand.vmem [shape: f32[1,128,1], index: 4, kind: input, shape index: {}]
  %s5 = inlined_call_operand.vmem [shape: f32[4,128], index: 5, kind: input, shape index: {}]
  %s6 = inlined_call_operand.vmem [shape: f32[4,1], index: 6, kind: input, shape index: {}]
  %s7 = inlined_call_operand.hbm [shape: f32[1,256], index: 7, kind: output, shape index: {}]
  %s8 = sld [smem:[#allocation0]]
  $region61: #{forward.1} parent=0
    _
  %s10 = ssub.s32 1, %s8
  %s11 = scalar_select 0, %s10, %s8
  $region1: #{forward.1} parent=0
    #allocation2 [shape = 'u8[1024]{0}', space=vmem, size = 0x400, scoped, tag = 'output window, operand 0']
    #allocation3 [shape = 's32[2]{0}', space=sflag, size = 0x8, scoped, tag = 'scoped memory for forward.1']
    %12 = vsyncpa [#allocation3], 0
    %s13 = scalar_lea.sflag [#allocation3], 1
    %14 = vsyncpa %s13, 0
    loop: start=0, step=1, limit=4
    $region2: #{forward.1} parent=1 // loop_pre_header
      _
    $region3: #{forward.1} parent=1 // loop_header
      %s16 = sphi 0, %s20
      %p17 = scmp.ge.s32.totalorder %s16, 4
      %s26 = sphi 0, %s28
      %s29 = sphi 0, %s26
      %s30 = sphi 0, %s29
      %s46 = sphi 0, %s30
      %s50 = sphi 0, %s50
      %s52 = sphi 0, %s50
      %s53 = sphi 0, %s52
      %s67 = sphi 0, %s53
      %s71 = sphi 0, %s71
      %s73 = sphi 0, %s71
      %s74 = sphi 0, %s73
      %s88 = sphi 0, %s74
      %s92 = sphi 0, %s92
      %s94 = sphi 0, %s92
      %s95 = sphi 0, %s94
      %s109 = sphi 0, %s95
      %s113 = sphi 0, %s113
      %s115 = sphi 0, %s113
      %s116 = sphi 0, %s115
      %s130 = sphi 0, %s116
      %s134 = sphi 0, %s134
      %s136 = sphi 0, %s134
      %s137 = sphi 0, %s136
      %s151 = sphi 0, %s137
      %s155 = sphi 0, %s155
      %s157 = sphi 0, %s155
      %s158 = sphi 0, %s157
      %s172 = sphi 0, %s158
      %s178 = sphi 0, %s180
      %s181 = sphi 0, %s178
      %s182 = sphi 0, %s181
      %s198 = sphi 0, %s182
    $region4: #{forward.1} parent=1 // loop_header_branch
      %19 = sbr.rel (%p17) target = $region8
    $region5: #{forward.1} parent=1 // loop_body
      %s21 = ssub.s32 %s16, 1
      %s22 = ssub.s32 %s16, 2
      %s23 = sadd.s32 %s16, 1
      %s24 = ssub.s32 %s16, %s23
      %p25 = scmp.eq.s32.totalorder %s24, 0
      %s27 = sadd.s32 %s26, 1
      %s28 = scalar_select %p25, %s26, %s27
      %p31 = pneg %p25
      %p32 = scmp.eq.s32.totalorder %s16, 1
      %p33 = por %p31, %p32
      %p34 = scmp.ne.s32.totalorder %s26, %s29
      %p35 = scmp.eq.s32.totalorder %s16, 0
      %p36 = por %p34, %p35
      %p37 = scmp.ne.s32.totalorder %s26, %s29
      %p38 = scmp.eq.s32.totalorder %s21, 1
      %p39 = por %p37, %p38
      %p40 = scmp.ne.s32.totalorder %s29, %s30
      %p41 = scmp.eq.s32.totalorder %s21, 0
      %p42 = por %p40, %p41
      %p43 = scmp.ne.s32.totalorder %s29, %s30
      %p44 = scmp.eq.s32.totalorder %s22, 1
      %p45 = por %p43, %p44
      %p47 = scmp.ne.s32.totalorder %s30, %s46
      %p48 = scmp.eq.s32.totalorder %s22, 0
      %p49 = por %p47, %p48
      %s51 = sadd.s32 %s50, 1
      %p54 = scmp.eq.s32.totalorder %s16, 1
      %p55 = scmp.ne.s32.totalorder %s50, %s52
      %p56 = scmp.eq.s32.totalorder %s16, 0
      %p57 = por %p55, %p56
      %p58 = scmp.ne.s32.totalorder %s50, %s52
      %p59 = scmp.eq.s32.totalorder %s21, 1
      %p60 = por %p58, %p59
      %p61 = scmp.ne.s32.totalorder %s52, %s53
      %p62 = scmp.eq.s32.totalorder %s21, 0
      %p63 = por %p61, %p62
      %p64 = scmp.ne.s32.totalorder %s52, %s53
      %p65 = scmp.eq.s32.totalorder %s22, 1
      %p66 = por %p64, %p65
      %p68 = scmp.ne.s32.totalorder %s53, %s67
      %p69 = scmp.eq.s32.totalorder %s22, 0
      %p70 = por %p68, %p69
      %s72 = sadd.s32 %s71, 1
      %p75 = scmp.eq.s32.totalorder %s16, 1
      %p76 = scmp.ne.s32.totalorder %s71, %s73
      %p77 = scmp.eq.s32.totalorder %s16, 0
      %p78 = por %p76, %p77
      %p79 = scmp.ne.s32.totalorder %s71, %s73
      %p80 = scmp.eq.s32.totalorder %s21, 1
      %p81 = por %p79, %p80
      %p82 = scmp.ne.s32.totalorder %s73, %s74
      %p83 = scmp.eq.s32.totalorder %s21, 0
      %p84 = por %p82, %p83
      %p85 = scmp.ne.s32.totalorder %s73, %s74
      %p86 = scmp.eq.s32.totalorder %s22, 1
      %p87 = por %p85, %p86
      %p89 = scmp.ne.s32.totalorder %s74, %s88
      %p90 = scmp.eq.s32.totalorder %s22, 0
      %p91 = por %p89, %p90
      %s93 = sadd.s32 %s92, 1
      %p96 = scmp.eq.s32.totalorder %s16, 1
      %p97 = scmp.ne.s32.totalorder %s92, %s94
      %p98 = scmp.eq.s32.totalorder %s16, 0
      %p99 = por %p97, %p98
      %p100 = scmp.ne.s32.totalorder %s92, %s94
      %p101 = scmp.eq.s32.totalorder %s21, 1
      %p102 = por %p100, %p101
      %p103 = scmp.ne.s32.totalorder %s94, %s95
      %p104 = scmp.eq.s32.totalorder %s21, 0
      %p105 = por %p103, %p104
      %p106 = scmp.ne.s32.totalorder %s94, %s95
      %p107 = scmp.eq.s32.totalorder %s22, 1
      %p108 = por %p106, %p107
      %p110 = scmp.ne.s32.totalorder %s95, %s109
      %p111 = scmp.eq.s32.totalorder %s22, 0
      %p112 = por %p110, %p111
      %s114 = sadd.s32 %s113, 1
      %p117 = scmp.eq.s32.totalorder %s16, 1
      %p118 = scmp.ne.s32.totalorder %s113, %s115
      %p119 = scmp.eq.s32.totalorder %s16, 0
      %p120 = por %p118, %p119
      %p121 = scmp.ne.s32.totalorder %s113, %s115
      %p122 = scmp.eq.s32.totalorder %s21, 1
      %p123 = por %p121, %p122
      %p124 = scmp.ne.s32.totalorder %s115, %s116
      %p125 = scmp.eq.s32.totalorder %s21, 0
      %p126 = por %p124, %p125
      %p127 = scmp.ne.s32.totalorder %s115, %s116
      %p128 = scmp.eq.s32.totalorder %s22, 1
      %p129 = por %p127, %p128
      %p131 = scmp.ne.s32.totalorder %s116, %s130
      %p132 = scmp.eq.s32.totalorder %s22, 0
      %p133 = por %p131, %p132
      %s135 = sadd.s32 %s134, 1
      %p138 = scmp.eq.s32.totalorder %s16, 1
      %p139 = scmp.ne.s32.totalorder %s134, %s136
      %p140 = scmp.eq.s32.totalorder %s16, 0
      %p141 = por %p139, %p140
      %p142 = scmp.ne.s32.totalorder %s134, %s136
      %p143 = scmp.eq.s32.totalorder %s21, 1
      %p144 = por %p142, %p143
      %p145 = scmp.ne.s32.totalorder %s136, %s137
      %p146 = scmp.eq.s32.totalorder %s21, 0
      %p147 = por %p145, %p146
      %p148 = scmp.ne.s32.totalorder %s136, %s137
      %p149 = scmp.eq.s32.totalorder %s22, 1
      %p150 = por %p148, %p149
      %p152 = scmp.ne.s32.totalorder %s137, %s151
      %p153 = scmp.eq.s32.totalorder %s22, 0
      %p154 = por %p152, %p153
      %s156 = sadd.s32 %s155, 1
      %p159 = scmp.eq.s32.totalorder %s16, 1
      %p160 = scmp.ne.s32.totalorder %s155, %s157
      %p161 = scmp.eq.s32.totalorder %s16, 0
      %p162 = por %p160, %p161
      %p163 = scmp.ne.s32.totalorder %s155, %s157
      %p164 = scmp.eq.s32.totalorder %s21, 1
      %p165 = por %p163, %p164
      %p166 = scmp.ne.s32.totalorder %s157, %s158
      %p167 = scmp.eq.s32.totalorder %s21, 0
      %p168 = por %p166, %p167
      %p169 = scmp.ne.s32.totalorder %s157, %s158
      %p170 = scmp.eq.s32.totalorder %s22, 1
      %p171 = por %p169, %p170
      %p173 = scmp.ne.s32.totalorder %s158, %s172
      %p174 = scmp.eq.s32.totalorder %s22, 0
      %p175 = por %p173, %p174
      %s176 = ssub.s32 %s16, %s23
      %p177 = scmp.eq.s32.totalorder %s176, 0
      %s179 = sadd.s32 %s178, 1
      %s180 = scalar_select %p177, %s178, %s179
      %p183 = pneg %p177
      %p184 = scmp.eq.s32.totalorder %s16, 1
      %p185 = por %p183, %p184
      %p186 = scmp.ne.s32.totalorder %s178, %s181
      %p187 = scmp.eq.s32.totalorder %s16, 0
      %p188 = por %p186, %p187
      %p189 = scmp.ne.s32.totalorder %s178, %s181
      %p190 = scmp.eq.s32.totalorder %s21, 1
      %p191 = por %p189, %p190
      %p192 = scmp.ne.s32.totalorder %s181, %s182
      %p193 = scmp.eq.s32.totalorder %s21, 0
      %p194 = por %p192, %p193
      %p195 = scmp.ne.s32.totalorder %s181, %s182
      %p196 = scmp.eq.s32.totalorder %s22, 1
      %p197 = por %p195, %p196
      %p199 = scmp.ne.s32.totalorder %s182, %s198
      %p200 = scmp.eq.s32.totalorder %s22, 0
      %p201 = por %p199, %p200
      %p202 = scmp.le.s32.totalorder 1, %s16
      %p203 = scmp.lt.s32.totalorder %s16, 3
      %p204 = pnand %p202, %p203
      %p205 = pneg %p204
      // Predicated region
      $region9: #{forward.1} parent=5 // pred_check
        _
      $region10: #{forward.1} parent=5 // pred_check_branch
        %207 = sbr.rel (%p204) target = $region12
      $region11: #{forward.1} parent=5 // pred_region
        %s208 = ssub.s32 %s16, 1
        // Predicated region
        $region13: #{forward.1} parent=11 // pred_check
          %p209 = pneg %p63
        $region14: #{forward.1} parent=11 // pred_check_branch
          %211 = sbr.rel (%p209) target = $region16
        $region15: #{forward.1} parent=11 // pred_region
          _
        $region16: #{forward.1} parent=11 // pred_fallthru
          _
        // Predicated region
        $region17: #{forward.1} parent=11 // pred_check
          %p212 = pneg %p84
        $region18: #{forward.1} parent=11 // pred_check_branch
          %214 = sbr.rel (%p212) target = $region20
        $region19: #{forward.1} parent=11 // pred_region
          _
        $region20: #{forward.1} parent=11 // pred_fallthru
          _
        // Predicated region
        $region21: #{forward.1} parent=11 // pred_check
          %p215 = pneg %p105
        $region22: #{forward.1} parent=11 // pred_check_branch
          %217 = sbr.rel (%p215) target = $region24
        $region23: #{forward.1} parent=11 // pred_region
          _
        $region24: #{forward.1} parent=11 // pred_fallthru
          _
        // Predicated region
        $region25: #{forward.1} parent=11 // pred_check
          %p218 = pneg %p126
        $region26: #{forward.1} parent=11 // pred_check_branch
          %220 = sbr.rel (%p218) target = $region28
        $region27: #{forward.1} parent=11 // pred_region
          _
        $region28: #{forward.1} parent=11 // pred_fallthru
          _
        // Predicated region
        $region29: #{forward.1} parent=11 // pred_check
          %p221 = pneg %p147
        $region30: #{forward.1} parent=11 // pred_check_branch
          %223 = sbr.rel (%p221) target = $region32
        $region31: #{forward.1} parent=11 // pred_region
          _
        $region32: #{forward.1} parent=11 // pred_fallthru
          _
        // Predicated region
        $region33: #{forward.1} parent=11 // pred_check
          %p224 = pneg %p168
        $region34: #{forward.1} parent=11 // pred_check_branch
          %226 = sbr.rel (%p224) target = $region36
        $region35: #{forward.1} parent=11 // pred_region
          _
        $region36: #{forward.1} parent=11 // pred_fallthru
          _
      $region12: #{forward.1} parent=5 // pred_fallthru
        _
      %p227 = scmp.lt.s32.totalorder %s16, 2
      // Predicated region
      $region37: #{forward.1} parent=5 // pred_check
        %p228 = pneg %p227
      $region38: #{forward.1} parent=5 // pred_check_branch
        %230 = sbr.rel (%p228) target = $region40
      $region39: #{forward.1} parent=5 // pred_region
        // Predicated region
        $region41: #{forward.1} parent=39 // pred_check
          %p231 = pneg %p36
        $region42: #{forward.1} parent=39 // pred_check_branch
          %233 = sbr.rel (%p231) target = $region44
        $region43: #{forward.1} parent=39 // pred_region
          %p234 = scmp.lt.s32.totalorder %s16, 1
          %s235 = scalar_select %p234, %s16, 1
          %s236 = scalar_lea.vmem %s0, %s235
        $region44: #{forward.1} parent=39 // pred_fallthru
          _
      $region40: #{forward.1} parent=5 // pred_fallthru
        _
      %p237 = scmp.le.s32.totalorder 1, %s16
      %p238 = scmp.lt.s32.totalorder %s16, 3
      %p239 = pnand %p237, %p238
      %p240 = pneg %p239
      // Predicated region
      $region45: #{forward.1} parent=5 // pred_check
        _
      $region46: #{forward.1} parent=5 // pred_check_branch
        %242 = sbr.rel (%p239) target = $region48
      $region47: #{forward.1} parent=5 // pred_region
        %s243 = ssub.s32 %s16, 1
        %p244 = scmp.lt.s32.totalorder %s21, 1
        %s245 = scalar_select %p244, %s21, 1
        %s246 = scalar_lea.vmem %s0, %s245
        %p247 = pneg %p42
        %p248 = pneg %p39
        %p249 = pneg %p63
        %p250 = pneg %p60
        %p251 = pneg %p84
        %p252 = pneg %p81
        %p253 = pneg %p105
        %p254 = pneg %p102
        %p255 = pneg %p126
        %p256 = pneg %p123
        %p257 = pneg %p147
        %p258 = pneg %p144
        %p259 = pneg %p168
        %p260 = pneg %p165
        %p261 = pneg %p194
        %p262 = pneg %p191
        %s263 = sand.u32 %s181, 1
        %s264 = scalar_lea.sflag [#allocation3], %s263
        %s265 = sand.u32 %s181, 1
        %s266 = scalar_lea.vmem [#allocation2], %s265
        %p267 = scmp.lt.s32.totalorder %s21, 1
        %s268 = scalar_select %p267, %s21, 1
        %s269 = scalar_lea.vmem %s0, %s268
        %v270 = vld [vmem:[%s269] sm:$0x1]
        %v271 = vld [vmem:[%s1] sm:$0xff]
        %v272 = vld [vmem:[%s1 + $0x8] sm:$0xff]
        %v273 = vld [vmem:[%s1 + $0x10] sm:$0xff]
        %v274 = vld [vmem:[%s1 + $0x18] sm:$0xff]
        %v275 = vld [vmem:[%s1 + $0x20] sm:$0xff]
        %v276 = vld [vmem:[%s1 + $0x28] sm:$0xff]
        %v277 = vld [vmem:[%s1 + $0x30] sm:$0xff]
        %v278 = vld [vmem:[%s1 + $0x38] sm:$0xff]
        %v279 = vld [vmem:[%s1 + $0x40] sm:$0xff]
        %v280 = vld [vmem:[%s1 + $0x48] sm:$0xff]
        %v281 = vld [vmem:[%s1 + $0x50] sm:$0xff]
        %v282 = vld [vmem:[%s1 + $0x58] sm:$0xff]
        %v283 = vld [vmem:[%s1 + $0x60] sm:$0xff]
        %v284 = vld [vmem:[%s1 + $0x68] sm:$0xff]
        %v285 = vld [vmem:[%s1 + $0x70] sm:$0xff]
        %v286 = vld [vmem:[%s1 + $0x78] sm:$0xff]
        %288 = vset.pattern.permute.xlu0 0
        %289 = vperm.xlu0 %288, %v271
        %v290 = vpop.permute.xlu0 %289
        %293 = vset.pattern.permute.xlu0 0
        %294 = vperm.xlu0 %293, %v272
        %v295 = vpop.permute.xlu0 %294
        %298 = vset.pattern.permute.xlu0 0
        %299 = vperm.xlu0 %298, %v273
        %v300 = vpop.permute.xlu0 %299
        %303 = vset.pattern.permute.xlu0 0
        %304 = vperm.xlu0 %303, %v274
        %v305 = vpop.permute.xlu0 %304
        %308 = vset.pattern.permute.xlu0 0
        %309 = vperm.xlu0 %308, %v275
        %v310 = vpop.permute.xlu0 %309
        %313 = vset.pattern.permute.xlu0 0
        %314 = vperm.xlu0 %313, %v276
        %v315 = vpop.permute.xlu0 %314
        %318 = vset.pattern.permute.xlu0 0
        %319 = vperm.xlu0 %318, %v277
        %v320 = vpop.permute.xlu0 %319
        %323 = vset.pattern.permute.xlu0 0
        %324 = vperm.xlu0 %323, %v278
        %v325 = vpop.permute.xlu0 %324
        %328 = vset.pattern.permute.xlu0 0
        %329 = vperm.xlu0 %328, %v279
        %v330 = vpop.permute.xlu0 %329
        %333 = vset.pattern.permute.xlu0 0
        %334 = vperm.xlu0 %333, %v280
        %v335 = vpop.permute.xlu0 %334
        %338 = vset.pattern.permute.xlu0 0
        %339 = vperm.xlu0 %338, %v281
        %v340 = vpop.permute.xlu0 %339
        %343 = vset.pattern.permute.xlu0 0
        %344 = vperm.xlu0 %343, %v282
        %v345 = vpop.permute.xlu0 %344
        %348 = vset.pattern.permute.xlu0 0
        %349 = vperm.xlu0 %348, %v283
        %v350 = vpop.permute.xlu0 %349
        %353 = vset.pattern.permute.xlu0 0
        %354 = vperm.xlu0 %353, %v284
        %v355 = vpop.permute.xlu0 %354
        %358 = vset.pattern.permute.xlu0 0
        %359 = vperm.xlu0 %358, %v285
        %v360 = vpop.permute.xlu0 %359
        %363 = vset.pattern.permute.xlu0 0
        %364 = vperm.xlu0 %363, %v286
        %v365 = vpop.permute.xlu0 %364
        %v368 = vlaneseq
        %v369 = vshrl.u32 %v368, 7
        %v370 = vsub.s32 0, %v369
        %v371 = vrot.slane %v270, %v370
        %v373 = vmul.f32 %v290, %v371
        %v374 = vmul.f32 %v295, %v371
        %v375 = vmul.f32 %v300, %v371
        %v376 = vmul.f32 %v305, %v371
        %v377 = vmul.f32 %v310, %v371
        %v378 = vmul.f32 %v315, %v371
        %v379 = vmul.f32 %v320, %v371
        %v380 = vmul.f32 %v325, %v371
        %v381 = vmul.f32 %v330, %v371
        %v382 = vmul.f32 %v335, %v371
        %v383 = vmul.f32 %v340, %v371
        %v384 = vmul.f32 %v345, %v371
        %v385 = vmul.f32 %v350, %v371
        %v386 = vmul.f32 %v355, %v371
        %v387 = vmul.f32 %v360, %v371
        %v388 = vmul.f32 %v365, %v371
        %v389 = vld [vmem:[%s2] sm:$0xff]
        %v390 = vld [vmem:[%s2 + $0x8] sm:$0xff]
        %v391 = vld [vmem:[%s2 + $0x10] sm:$0xff]
        %v392 = vld [vmem:[%s2 + $0x18] sm:$0xff]
        %v393 = vld [vmem:[%s2 + $0x20] sm:$0xff]
        %v394 = vld [vmem:[%s2 + $0x28] sm:$0xff]
        %v395 = vld [vmem:[%s2 + $0x30] sm:$0xff]
        %v396 = vld [vmem:[%s2 + $0x38] sm:$0xff]
        %v397 = vld [vmem:[%s2 + $0x40] sm:$0xff]
        %v398 = vld [vmem:[%s2 + $0x48] sm:$0xff]
        %v399 = vld [vmem:[%s2 + $0x50] sm:$0xff]
        %v400 = vld [vmem:[%s2 + $0x58] sm:$0xff]
        %v401 = vld [vmem:[%s2 + $0x60] sm:$0xff]
        %v402 = vld [vmem:[%s2 + $0x68] sm:$0xff]
        %v403 = vld [vmem:[%s2 + $0x70] sm:$0xff]
        %v404 = vld [vmem:[%s2 + $0x78] sm:$0xff]
        %406 = vset.pattern.permute.xlu0 0
        %407 = vperm.xlu0 %406, %v389
        %v408 = vpop.permute.xlu0 %407
        %411 = vset.pattern.permute.xlu0 0
        %412 = vperm.xlu0 %411, %v390
        %v413 = vpop.permute.xlu0 %412
        %416 = vset.pattern.permute.xlu0 0
        %417 = vperm.xlu0 %416, %v391
        %v418 = vpop.permute.xlu0 %417
        %421 = vset.pattern.permute.xlu0 0
        %422 = vperm.xlu0 %421, %v392
        %v423 = vpop.permute.xlu0 %422
        %426 = vset.pattern.permute.xlu0 0
        %427 = vperm.xlu0 %426, %v393
        %v428 = vpop.permute.xlu0 %427
        %431 = vset.pattern.permute.xlu0 0
        %432 = vperm.xlu0 %431, %v394
        %v433 = vpop.permute.xlu0 %432
        %436 = vset.pattern.permute.xlu0 0
        %437 = vperm.xlu0 %436, %v395
        %v438 = vpop.permute.xlu0 %437
        %441 = vset.pattern.permute.xlu0 0
        %442 = vperm.xlu0 %441, %v396
        %v443 = vpop.permute.xlu0 %442
        %446 = vset.pattern.permute.xlu0 0
        %447 = vperm.xlu0 %446, %v397
        %v448 = vpop.permute.xlu0 %447
        %451 = vset.pattern.permute.xlu0 0
        %452 = vperm.xlu0 %451, %v398
        %v453 = vpop.permute.xlu0 %452
        %456 = vset.pattern.permute.xlu0 0
        %457 = vperm.xlu0 %456, %v399
        %v458 = vpop.permute.xlu0 %457
        %461 = vset.pattern.permute.xlu0 0
        %462 = vperm.xlu0 %461, %v400
        %v463 = vpop.permute.xlu0 %462
        %466 = vset.pattern.permute.xlu0 0
        %467 = vperm.xlu0 %466, %v401
        %v468 = vpop.permute.xlu0 %467
        %471 = vset.pattern.permute.xlu0 0
        %472 = vperm.xlu0 %471, %v402
        %v473 = vpop.permute.xlu0 %472
        %476 = vset.pattern.permute.xlu0 0
        %477 = vperm.xlu0 %476, %v403
        %v478 = vpop.permute.xlu0 %477
        %481 = vset.pattern.permute.xlu0 0
        %482 = vperm.xlu0 %481, %v404
        %v483 = vpop.permute.xlu0 %482
        %v485 = vadd.f32 %v373, %v408
        %v486 = vadd.f32 %v374, %v413
        %v487 = vadd.f32 %v375, %v418
        %v488 = vadd.f32 %v376, %v423
        %v489 = vadd.f32 %v377, %v428
        %v490 = vadd.f32 %v378, %v433
        %v491 = vadd.f32 %v379, %v438
        %v492 = vadd.f32 %v380, %v443
        %v493 = vadd.f32 %v381, %v448
        %v494 = vadd.f32 %v382, %v453
        %v495 = vadd.f32 %v383, %v458
        %v496 = vadd.f32 %v384, %v463
        %v497 = vadd.f32 %v385, %v468
        %v498 = vadd.f32 %v386, %v473
        %v499 = vadd.f32 %v387, %v478
        %v500 = vadd.f32 %v388, %v483
        %v501 = vtanh.pop %v485
        %v502 = vtanh.pop %v486
        %v503 = vtanh.pop %v487
        %v504 = vtanh.pop %v488
        %v505 = vtanh.pop %v489
        %v506 = vtanh.pop %v490
        %v507 = vtanh.pop %v491
        %v508 = vtanh.pop %v492
        %v509 = vtanh.pop %v493
        %v510 = vtanh.pop %v494
        %v511 = vtanh.pop %v495
        %v512 = vtanh.pop %v496
        %v513 = vtanh.pop %v497
        %v514 = vtanh.pop %v498
        %v515 = vtanh.pop %v499
        %v516 = vtanh.pop %v500
        %v517 = vld [vmem:[%s3] sm:$0xff]
        %v518 = vld [vmem:[%s3 + $0x8] sm:$0xff]
        %v519 = vld [vmem:[%s3 + $0x10] sm:$0xff]
        %v520 = vld [vmem:[%s3 + $0x18] sm:$0xff]
        %v521 = vld [vmem:[%s3 + $0x20] sm:$0xff]
        %v522 = vld [vmem:[%s3 + $0x28] sm:$0xff]
        %v523 = vld [vmem:[%s3 + $0x30] sm:$0xff]
        %v524 = vld [vmem:[%s3 + $0x38] sm:$0xff]
        %v525 = vld [vmem:[%s3 + $0x40] sm:$0xff]
        %v526 = vld [vmem:[%s3 + $0x48] sm:$0xff]
        %v527 = vld [vmem:[%s3 + $0x50] sm:$0xff]
        %v528 = vld [vmem:[%s3 + $0x58] sm:$0xff]
        %v529 = vld [vmem:[%s3 + $0x60] sm:$0xff]
        %v530 = vld [vmem:[%s3 + $0x68] sm:$0xff]
        %v531 = vld [vmem:[%s3 + $0x70] sm:$0xff]
        %v532 = vld [vmem:[%s3 + $0x78] sm:$0xff]
        %v533 = vld [vmem:[%s4] sm:$0xff]
        %v534 = vld [vmem:[%s4 + $0x8] sm:$0xff]
        %v535 = vld [vmem:[%s4 + $0x10] sm:$0xff]
        %v536 = vld [vmem:[%s4 + $0x18] sm:$0xff]
        %v537 = vld [vmem:[%s4 + $0x20] sm:$0xff]
        %v538 = vld [vmem:[%s4 + $0x28] sm:$0xff]
        %v539 = vld [vmem:[%s4 + $0x30] sm:$0xff]
        %v540 = vld [vmem:[%s4 + $0x38] sm:$0xff]
        %v541 = vld [vmem:[%s4 + $0x40] sm:$0xff]
        %v542 = vld [vmem:[%s4 + $0x48] sm:$0xff]
        %v543 = vld [vmem:[%s4 + $0x50] sm:$0xff]
        %v544 = vld [vmem:[%s4 + $0x58] sm:$0xff]
        %v545 = vld [vmem:[%s4 + $0x60] sm:$0xff]
        %v546 = vld [vmem:[%s4 + $0x68] sm:$0xff]
        %v547 = vld [vmem:[%s4 + $0x70] sm:$0xff]
        %v548 = vld [vmem:[%s4 + $0x78] sm:$0xff]
        %550 = vset.pattern.permute.xlu0 0
        %551 = vperm.xlu0 %550, %v533
        %v552 = vpop.permute.xlu0 %551
        %555 = vset.pattern.permute.xlu0 0
        %556 = vperm.xlu0 %555, %v534
        %v557 = vpop.permute.xlu0 %556
        %560 = vset.pattern.permute.xlu0 0
        %561 = vperm.xlu0 %560, %v535
        %v562 = vpop.permute.xlu0 %561
        %565 = vset.pattern.permute.xlu0 0
        %566 = vperm.xlu0 %565, %v536
        %v567 = vpop.permute.xlu0 %566
        %570 = vset.pattern.permute.xlu0 0
        %571 = vperm.xlu0 %570, %v537
        %v572 = vpop.permute.xlu0 %571
        %575 = vset.pattern.permute.xlu0 0
        %576 = vperm.xlu0 %575, %v538
        %v577 = vpop.permute.xlu0 %576
        %580 = vset.pattern.permute.xlu0 0
        %581 = vperm.xlu0 %580, %v539
        %v582 = vpop.permute.xlu0 %581
        %585 = vset.pattern.permute.xlu0 0
        %586 = vperm.xlu0 %585, %v540
        %v587 = vpop.permute.xlu0 %586
        %590 = vset.pattern.permute.xlu0 0
        %591 = vperm.xlu0 %590, %v541
        %v592 = vpop.permute.xlu0 %591
        %595 = vset.pattern.permute.xlu0 0
        %596 = vperm.xlu0 %595, %v542
        %v597 = vpop.permute.xlu0 %596
        %600 = vset.pattern.permute.xlu0 0
        %601 = vperm.xlu0 %600, %v543
        %v602 = vpop.permute.xlu0 %601
        %605 = vset.pattern.permute.xlu0 0
        %606 = vperm.xlu0 %605, %v544
        %v607 = vpop.permute.xlu0 %606
        %610 = vset.pattern.permute.xlu0 0
        %611 = vperm.xlu0 %610, %v545
        %v612 = vpop.permute.xlu0 %611
        %615 = vset.pattern.permute.xlu0 0
        %616 = vperm.xlu0 %615, %v546
        %v617 = vpop.permute.xlu0 %616
        %620 = vset.pattern.permute.xlu0 0
        %621 = vperm.xlu0 %620, %v547
        %v622 = vpop.permute.xlu0 %621
        %625 = vset.pattern.permute.xlu0 0
        %626 = vperm.xlu0 %625, %v548
        %v627 = vpop.permute.xlu0 %626
        %629 = vmatprep.subr.mxu0 0.0
        %630 = vmatpush1.msra.mxu0 %v501
        %631 = vmatprep.subr.mxu0 0.0
        %632 = vmatpush1.msra.mxu0 %v502
        %633 = vmatprep.subr.mxu0 0.0
        %634 = vmatpush1.msra.mxu0 %v503
        %635 = vmatprep.subr.mxu0 0.0
        %636 = vmatpush1.msra.mxu0 %v504
        %637 = vmatprep.subr.mxu0 0.0
        %638 = vmatpush1.msra.mxu0 %v505
        %639 = vmatprep.subr.mxu0 0.0
        %640 = vmatpush1.msra.mxu0 %v506
        %641 = vmatprep.subr.mxu0 0.0
        %642 = vmatpush1.msra.mxu0 %v507
        %643 = vmatprep.subr.mxu0 0.0
        %644 = vmatpush1.msra.mxu0 %v508
        %645 = vmatprep.subr.mxu0 0.0
        %646 = vmatpush1.msra.mxu0 %v509
        %647 = vmatprep.subr.mxu0 0.0
        %648 = vmatpush1.msra.mxu0 %v510
        %649 = vmatprep.subr.mxu0 0.0
        %650 = vmatpush1.msra.mxu0 %v511
        %651 = vmatprep.subr.mxu0 0.0
        %652 = vmatpush1.msra.mxu0 %v512
        %653 = vmatprep.subr.mxu0 0.0
        %654 = vmatpush1.msra.mxu0 %v513
        %655 = vmatprep.subr.mxu0 0.0
        %656 = vmatpush1.msra.mxu0 %v514
        %657 = vmatprep.subr.mxu0 0.0
        %658 = vmatpush1.msra.mxu0 %v515
        %659 = vmatprep.subr.mxu0 0.0
        %660 = vmatpush1.msra.mxu0 %v516
        %661 = vmatprep.subr.mxu0 0.0
        %662 = vmatpush1.msra.mxu0 0.0
        %663 = vmatprep.subr.mxu0 0.0
        %664 = vmatpush1.msra.mxu0 0.0
        %665 = vmatprep.subr.mxu0 0.0
        %666 = vmatpush1.msra.mxu0 0.0
        %667 = vmatprep.subr.mxu0 0.0
        %668 = vmatpush1.msra.mxu0 0.0
        %669 = vmatprep.subr.mxu0 0.0
        %670 = vmatpush1.msra.mxu0 0.0
        %671 = vmatprep.subr.mxu0 0.0
        %672 = vmatpush1.msra.mxu0 0.0
        %673 = vmatprep.subr.mxu0 0.0
        %674 = vmatpush1.msra.mxu0 0.0
        %675 = vmatprep.subr.mxu0 0.0
        %676 = vmatpush1.msra.mxu0 0.0
        %677 = vmatprep.subr.mxu0 0.0
        %678 = vmatpush1.msra.mxu0 0.0
        %679 = vmatprep.subr.mxu0 0.0
        %680 = vmatpush1.msra.mxu0 0.0
        %681 = vmatprep.subr.mxu0 0.0
        %682 = vmatpush1.msra.mxu0 0.0
        %683 = vmatprep.subr.mxu0 0.0
        %684 = vmatpush1.msra.mxu0 0.0
        %685 = vmatprep.subr.mxu0 0.0
        %686 = vmatpush1.msra.mxu0 0.0
        %687 = vmatprep.subr.mxu0 0.0
        %688 = vmatpush1.msra.mxu0 0.0
        %689 = vmatprep.subr.mxu0 0.0
        %690 = vmatpush1.msra.mxu0 0.0
        %691 = vmatprep.subr.mxu0 0.0
        %692 = vmatpush1.msra.mxu0 0.0
        %693 = vmatprep.mubr.f32.mxu0 0.0
        %694 = vmatmul.mubr.f32.gmra.mrb[0].mxu0 %v517
        %v695 = vpop.f32.mrb[0].mxu0
        %v696 = vadd.f32 %v552, %v695
        %v697 = vpop.f32.mrb[0].mxu0
        %698 = vmatprep.mubr.f32.mxu0 0.0
        %699 = vmatmul.mubr.f32.gmra.mrb[0].mxu0 %v518
        %v700 = vpop.f32.mrb[0].mxu0
        %v701 = vadd.f32 %v557, %v700
        %v702 = vpop.f32.mrb[0].mxu0
        %703 = vmatprep.mubr.f32.mxu0 0.0
        %704 = vmatmul.mubr.f32.gmra.mrb[0].mxu0 %v519
        %v705 = vpop.f32.mrb[0].mxu0
        %v706 = vadd.f32 %v562, %v705
        %v707 = vpop.f32.mrb[0].mxu0
        %708 = vmatprep.mubr.f32.mxu0 0.0
        %709 = vmatmul.mubr.f32.gmra.mrb[0].mxu0 %v520
        %v710 = vpop.f32.mrb[0].mxu0
        %v711 = vadd.f32 %v567, %v710
        %v712 = vpop.f32.mrb[0].mxu0
        %713 = vmatprep.mubr.f32.mxu0 0.0
        %714 = vmatmul.mubr.f32.gmra.mrb[0].mxu0 %v521
        %v715 = vpop.f32.mrb[0].mxu0
        %v716 = vadd.f32 %v572, %v715
        %v717 = vpop.f32.mrb[0].mxu0
        %718 = vmatprep.mubr.f32.mxu0 0.0
        %719 = vmatmul.mubr.f32.gmra.mrb[0].mxu0 %v522
        %v720 = vpop.f32.mrb[0].mxu0
        %v721 = vadd.f32 %v577, %v720
        %v722 = vpop.f32.mrb[0].mxu0
        %723 = vmatprep.mubr.f32.mxu0 0.0
        %724 = vmatmul.mubr.f32.gmra.mrb[0].mxu0 %v523
        %v725 = vpop.f32.mrb[0].mxu0
        %v726 = vadd.f32 %v582, %v725
        %v727 = vpop.f32.mrb[0].mxu0
        %728 = vmatprep.mubr.f32.mxu0 0.0
        %729 = vmatmul.mubr.f32.gmra.mrb[0].mxu0 %v524
        %v730 = vpop.f32.mrb[0].mxu0
        %v731 = vadd.f32 %v587, %v730
        %v732 = vpop.f32.mrb[0].mxu0
        %733 = vmatprep.mubr.f32.mxu0 0.0
        %734 = vmatmul.mubr.f32.gmra.mrb[0].mxu0 %v525
        %v735 = vpop.f32.mrb[0].mxu0
        %v736 = vadd.f32 %v592, %v735
        %v737 = vpop.f32.mrb[0].mxu0
        %738 = vmatprep.mubr.f32.mxu0 0.0
        %739 = vmatmul.mubr.f32.gmra.mrb[0].mxu0 %v526
        %v740 = vpop.f32.mrb[0].mxu0
        %v741 = vadd.f32 %v597, %v740
        %v742 = vpop.f32.mrb[0].mxu0
        %743 = vmatprep.mubr.f32.mxu0 0.0
        %744 = vmatmul.mubr.f32.gmra.mrb[0].mxu0 %v527
        %v745 = vpop.f32.mrb[0].mxu0
        %v746 = vadd.f32 %v602, %v745
        %v747 = vpop.f32.mrb[0].mxu0
        %748 = vmatprep.mubr.f32.mxu0 0.0
        %749 = vmatmul.mubr.f32.gmra.mrb[0].mxu0 %v528
        %v750 = vpop.f32.mrb[0].mxu0
        %v751 = vadd.f32 %v607, %v750
        %v752 = vpop.f32.mrb[0].mxu0
        %753 = vmatprep.mubr.f32.mxu0 0.0
        %754 = vmatmul.mubr.f32.gmra.mrb[0].mxu0 %v529
        %v755 = vpop.f32.mrb[0].mxu0
        %v756 = vadd.f32 %v612, %v755
        %v757 = vpop.f32.mrb[0].mxu0
        %758 = vmatprep.mubr.f32.mxu0 0.0
        %759 = vmatmul.mubr.f32.gmra.mrb[0].mxu0 %v530
        %v760 = vpop.f32.mrb[0].mxu0
        %v761 = vadd.f32 %v617, %v760
        %v762 = vpop.f32.mrb[0].mxu0
        %763 = vmatprep.mubr.f32.mxu0 0.0
        %764 = vmatmul.mubr.f32.gmra.mrb[0].mxu0 %v531
        %v765 = vpop.f32.mrb[0].mxu0
        %v766 = vadd.f32 %v622, %v765
        %v767 = vpop.f32.mrb[0].mxu0
        %768 = vmatprep.mubr.f32.mxu0 0.0
        %769 = vmatmul.mubr.f32.gmra.mrb[0].mxu0 %v532
        %v770 = vpop.f32.mrb[0].mxu0
        %v771 = vadd.f32 %v627, %v770
        %v772 = vpop.f32.mrb[0].mxu0
        %773 = vdwg.mxu0
        %v774 = vtanh.pop %v696
        %v775 = vtanh.pop %v701
        %v776 = vtanh.pop %v706
        %v777 = vtanh.pop %v711
        %v778 = vtanh.pop %v716
        %v779 = vtanh.pop %v721
        %v780 = vtanh.pop %v726
        %v781 = vtanh.pop %v731
        %v782 = vtanh.pop %v736
        %v783 = vtanh.pop %v741
        %v784 = vtanh.pop %v746
        %v785 = vtanh.pop %v751
        %v786 = vtanh.pop %v756
        %v787 = vtanh.pop %v761
        %v788 = vtanh.pop %v766
        %v789 = vtanh.pop %v771
        %v790 = vld [vmem:[%s5] sm:$0xf]
        %v791 = vld [vmem:[%s6] sm:$0xf]
        %793 = vset.pattern.permute.xlu0 0
        %794 = vperm.xlu0 %793, %v791
        %v795 = vpop.permute.xlu0 %794
        %797 = vmatprep.subr.mxu0 0.0
        %798 = vmatpush1.msra.mxu0 %v774
        %799 = vmatprep.subr.mxu0 0.0
        %800 = vmatpush1.msra.mxu0 %v775
        %801 = vmatprep.subr.mxu0 0.0
        %802 = vmatpush1.msra.mxu0 %v776
        %803 = vmatprep.subr.mxu0 0.0
        %804 = vmatpush1.msra.mxu0 %v777
        %805 = vmatprep.subr.mxu0 0.0
        %806 = vmatpush1.msra.mxu0 %v778
        %807 = vmatprep.subr.mxu0 0.0
        %808 = vmatpush1.msra.mxu0 %v779
        %809 = vmatprep.subr.mxu0 0.0
        %810 = vmatpush1.msra.mxu0 %v780
        %811 = vmatprep.subr.mxu0 0.0
        %812 = vmatpush1.msra.mxu0 %v781
        %813 = vmatprep.subr.mxu0 0.0
        %814 = vmatpush1.msra.mxu0 %v782
        %815 = vmatprep.subr.mxu0 0.0
        %816 = vmatpush1.msra.mxu0 %v783
        %817 = vmatprep.subr.mxu0 0.0
        %818 = vmatpush1.msra.mxu0 %v784
        %819 = vmatprep.subr.mxu0 0.0
        %820 = vmatpush1.msra.mxu0 %v785
        %821 = vmatprep.subr.mxu0 0.0
        %822 = vmatpush1.msra.mxu0 %v786
        %823 = vmatprep.subr.mxu0 0.0
        %824 = vmatpush1.msra.mxu0 %v787
        %825 = vmatprep.subr.mxu0 0.0
        %826 = vmatpush1.msra.mxu0 %v788
        %827 = vmatprep.subr.mxu0 0.0
        %828 = vmatpush1.msra.mxu0 %v789
        %829 = vmatprep.subr.mxu0 0.0
        %830 = vmatpush1.msra.mxu0 0.0
        %831 = vmatprep.subr.mxu0 0.0
        %832 = vmatpush1.msra.mxu0 0.0
        %833 = vmatprep.subr.mxu0 0.0
        %834 = vmatpush1.msra.mxu0 0.0
        %835 = vmatprep.subr.mxu0 0.0
        %836 = vmatpush1.msra.mxu0 0.0
        %837 = vmatprep.subr.mxu0 0.0
        %838 = vmatpush1.msra.mxu0 0.0
        %839 = vmatprep.subr.mxu0 0.0
        %840 = vmatpush1.msra.mxu0 0.0
        %841 = vmatprep.subr.mxu0 0.0
        %842 = vmatpush1.msra.mxu0 0.0
        %843 = vmatprep.subr.mxu0 0.0
        %844 = vmatpush1.msra.mxu0 0.0
        %845 = vmatprep.subr.mxu0 0.0
        %846 = vmatpush1.msra.mxu0 0.0
        %847 = vmatprep.subr.mxu0 0.0
        %848 = vmatpush1.msra.mxu0 0.0
        %849 = vmatprep.subr.mxu0 0.0
        %850 = vmatpush1.msra.mxu0 0.0
        %851 = vmatprep.subr.mxu0 0.0
        %852 = vmatpush1.msra.mxu0 0.0
        %853 = vmatprep.subr.mxu0 0.0
        %854 = vmatpush1.msra.mxu0 0.0
        %855 = vmatprep.subr.mxu0 0.0
        %856 = vmatpush1.msra.mxu0 0.0
        %857 = vmatprep.subr.mxu0 0.0
        %858 = vmatpush1.msra.mxu0 0.0
        %859 = vmatprep.subr.mxu0 0.0
        %860 = vmatpush1.msra.mxu0 0.0
        %861 = vmatprep.mubr.f32.mxu0 0.0
        %862 = vmatmul.mubr.f32.gmra.mrb[0].mxu0 %v790
        %v863 = vpop.f32.mrb[0].mxu0
        %v864 = vadd.f32 %v795, %v863
        %v865 = vpop.f32.mrb[0].mxu0
        %866 = vdwg.mxu0
        %v867 = vlaneseq
        %v868 = vshrl.u32 %v867, 7
        %v869 = vcvt.s32.f32 %v868
        %v870 = vmul.f32 %v869, 0.5
        %v871 = vadd.f32 %v870, -1.0
        %v872 = vsub.f32 %v371, %v871
        %v873 = vmul.f32 %v872, 20.0
        %v874 = vxor.u32 %v873, 2147483648
        %v875 = vmul.f32 %v874, 1.442695
        %v876 = vpow.pop %v875
        %v877 = vadd.f32 %v876, 1.0
        %v878 = vrcp.pop %v877
        %v879 = vmul.f32 1.0, %v878
        %v880 = vadd.f32 %v871, 0.5
        %v881 = vsub.f32 %v880, %v371
        %v882 = vmul.f32 %v881, 20.0
        %v883 = vxor.u32 %v882, 2147483648
        %v884 = vmul.f32 %v883, 1.442695
        %v885 = vpow.pop %v884
        %v886 = vadd.f32 %v885, 1.0
        %v887 = vrcp.pop %v886
        %v888 = vmul.f32 1.0, %v887
        %vm889 = vcmp.eq.s32.totalorder %v868, 0
        %v890 = vsel %vm889, 1, 0
        %vm891 = vcmp.eq.s32.totalorder %v890, 1
        %v892 = vsel %vm891, 1.0, %v879
        %vm893 = vcmp.eq.s32.totalorder %v868, 3
        %v894 = vsel %vm893, 1, 0
        %vm895 = vcmp.eq.s32.totalorder %v894, 1
        %v896 = vsel %vm895, 1.0, %v888
        %v897 = vmul.f32 %v892, %v896
        %v898 = vmul.f32 %v897, %v864
        %vm899 = vcmask 1043456
        %v900 = vsel %vm899, %v898, 0.0
        %v901 = vrot.slane %v900, 4
        %v902 = vadd.f32 %v900, %v901
        %v903 = vrot.slane %v902, 2
        %v904 = vadd.f32 %v902, %v903
        %v905 = vrot.slane %v904, 1
        %v906 = vadd.f32 %v904, %v905
        %907 = vst [vmem:[%s266] sm:$0x1] %v906
        %s908 = sand.u32 %s181, 1
        %s909 = scalar_lea.sflag [#allocation3], %s908
        %s910 = sand.u32 %s181, 1
        %s911 = scalar_lea.vmem [#allocation2], %s910
        // Predicated region
        $region49: #{forward.1} parent=47 // pred_check
          %p912 = pneg %p191
        $region50: #{forward.1} parent=47 // pred_check_branch
          %914 = sbr.rel (%p912) target = $region52
        $region51: #{forward.1} parent=47 // pred_region
          %s916 = ssub.s32 16, 16
          %917 = vsyncadd %s909, %s916
          %s918 = smul.addr %s21, 16
          %s919 = scalar_lea.hbm %s7, %s918
          %s921 = sshll.u32 %s911, 4
          %s922 = int_to_ptr.vmem [resolvable:$true] %s921
          %924 = dma.vmem_to_hbm [thread:$0]  %s922, 16, %s919, %s909
        $region52: #{forward.1} parent=47 // pred_fallthru
          _
      $region48: #{forward.1} parent=5 // pred_fallthru
        _
      %p925 = scmp.le.s32.totalorder 2, %s16
      // Predicated region
      $region53: #{forward.1} parent=5 // pred_check
        %p926 = pneg %p925
      $region54: #{forward.1} parent=5 // pred_check_branch
        %928 = sbr.rel (%p926) target = $region56
      $region55: #{forward.1} parent=5 // pred_region
        %s929 = ssub.s32 %s16, 2
        // Predicated region
        $region57: #{forward.1} parent=55 // pred_check
          %p930 = pneg %p197
        $region58: #{forward.1} parent=55 // pred_check_branch
          %932 = sbr.rel (%p930) target = $region60
        $region59: #{forward.1} parent=55 // pred_region
          %s933 = sand.u32 %s182, 1
          %s934 = scalar_lea.sflag [#allocation3], %s933
          %s935 = sand.u32 %s182, 1
          %s936 = scalar_lea.vmem [#allocation2], %s935
          %937 = dma.done %s934, 16
        $region60: #{forward.1} parent=55 // pred_fallthru
          _
      $region56: #{forward.1} parent=5 // pred_fallthru
        _
    $region6: #{forward.1} parent=1 // loop_footer
      %s20 = sadd.s32 1, %s16
    $region7: #{forward.1} parent=1 // loop_footer_branch
      %15 = sbr.rel target = $region3
    $region8: #{forward.1} parent=1 // loop_exit
      _
    %938 = vsyncpa [#allocation3], 1
    %s939 = scalar_lea.sflag [#allocation3], 1
    %940 = vsyncpa %s939, 1

</llo_original>
